<compile_context>
chip_gen: v7x
topology: tpu7x:2x2x1
jax: 0.10.0
libtpu: 0.0.40
codegen_flags: <defaults>
</compile_context>

<pallas_src>
import functools

import jax
import jax.numpy as jnp
import numpy as np
from jax import lax
from jax.experimental import pallas as pl
from jax.experimental.pallas import tpu as pltpu

LRELU_SLOPE = 0.1
_HALO = 64          # halo rows per tile; >= K - stride for every layer, multiple of 8
_T_TILE_MAX = 512   # time-tile cap (reviewer: 512 ~ 85% of HBM roofline on v6e)
_CHUNK_LANES = 256  # target MXU contraction depth per matmul chunk


def _round_up(x, m):
    return ((x + m - 1) // m) * m


def _vmem_caps():
    """(tile budget, vmem_limit_bytes) derived from this generation's VMEM size."""
    try:
        cap = int(pltpu.get_tpu_info().vmem_capacity_bytes)
    except Exception:
        cap = 64 * 1024 * 1024          # conservative (v7x-sized) fallback
    budget = min(int(cap * 0.70), 96 * 1024 * 1024)
    limit = min(int(cap * 0.85), 110 * 1024 * 1024)
    return budget, limit


# ----------------------------------------------------------------------------
# Kernel A: halo-window grouped Conv1d (taps folded in-kernel) + fused bias/lrelu
# ----------------------------------------------------------------------------
def _window_conv_kernel(body_ref, halo_ref, w_ref, b_ref, o_ref, win_ref, *,
                        groups, cig, cog, k_taps, stride, t_tile, taps_per_chunk,
                        apply_lrelu):
    """One (n, t-tile) output slab.

    body_ref : (1, T_tile*stride, C_in)  bf16   non-overlapping input rows
    halo_ref : (1, 64, C_in)             bf16   next 64 input rows (overlap region)
    w_ref    : (G, K*Cig, Cog)           bf16   resident (constant index_map)
    b_ref    : (G, 1, Cog)               f32
    o_ref    : (1, T_tile, C_out)        bf16/f32
    win_ref  : (T_tile*stride + 64, C_in) bf16  VMEM scratch window
    """
    s = t_tile * stride
    # assemble the overlapping window once per tile (body ++ halo)
    win_ref[0:s, :] = body_ref[0]
    win_ref[s:, :] = halo_ref[0]

    for g in range(groups):                       # static unroll -> static lane offsets
        c0 = g * cig
        acc = jnp.zeros((t_tile, cog), jnp.float32)
        # taps folded into the contraction, in chunks of >= _CHUNK_LANES depth
        for k0 in range(0, k_taps, taps_per_chunk):
            kn = min(taps_per_chunk, k_taps - k0)
            pieces = []
            for j in range(kn):
                k = k0 + j
                if stride == 1:
                    tap = win_ref[k:k + t_tile, c0:c0 + cig]
                else:
                    tap = win_ref[pl.ds(k, t_tile, stride=stride), c0:c0 + cig]
                pieces.append(tap)
            lhs = pieces[0] if kn == 1 else jnp.concatenate(pieces, axis=1)
            rhs = w_ref[g, k0 * cig:(k0 + kn) * cig, :]
            acc = acc + jnp.dot(lhs, rhs, preferred_element_type=jnp.float32)
        y = acc + b_ref[g]
        if apply_lrelu:
            y = jnp.maximum(y, LRELU_SLOPE * y)
        o_ref[0, :, g * cog:(g + 1) * cog] = y.astype(o_ref.dtype)


# ----------------------------------------------------------------------------
# Kernel B: pre-folded (XLA im2col) conv for tiny C_in (layer 1 only, C_in = 1)
# ----------------------------------------------------------------------------
def _folded_conv_kernel(x_ref, w_ref, b_ref, o_ref, *, groups, cog, apply_lrelu):
    """x_ref: (1, G, T_tile, K*Cig) bf16; w_ref: (G, K*Cig, Cog); o_ref: (1, T_tile, C_out)."""
    for g in range(groups):
        y = jnp.dot(x_ref[0, g], w_ref[g], preferred_element_type=jnp.float32)
        y = y + b_ref[g]
        if apply_lrelu:
            y = jnp.maximum(y, LRELU_SLOPE * y)
        o_ref[0, :, g * cog:(g + 1) * cog] = y.astype(o_ref.dtype)


def _choose_t_tile_window(n, t_out, c_in, c_out, g, kc, cog, stride, out_bytes, budget):
    """Largest multiple-of-64 T_out tile that keeps all blocks inside the VMEM budget."""
    per_t = (2 * stride * c_in * 2       # body block, double-buffered, bf16
             + stride * c_in * 2         # window scratch (body rows)
             + 2 * c_out * out_bytes     # output block, double-buffered
             + 3 * c_out * 4)            # f32 accumulators / value slack
    fixed = (2 * g * kc * cog * 2        # resident weight (pipeline double-buffers it)
             + 2 * g * cog * 4           # bias
             + 3 * _HALO * c_in * 2      # halo blocks + scratch halo rows
             + (2 << 20))                # misc slack
    avail = max(budget - fixed, 64 * per_t)
    t = max(64, min(_T_TILE_MAX, (avail // per_t) // 64 * 64))
    t = min(t, max(64, _round_up(t_out, 64)))
    if n == 1:  # keep >= 2 grid steps when possible so both v7x TensorCores stay busy
        t = min(t, max(64, _round_up((t_out + 1) // 2, 64)))
    return t


def conv1d_lrelu_pallas(x_ntc, w_oik, b_o, *, stride, padding, groups, apply_lrelu,
                        out_dtype=jnp.bfloat16):
    """Grouped strided 1-D convolution (+ optional fused leaky-relu).

    x_ntc : (N, T, C_in)          channels-last activations (any float dtype)
    w_oik : (C_out, C_in//G, K)   PyTorch Conv1d weight layout
    b_o   : (C_out,)
    returns (N, T_out, C_out) in `out_dtype`, channels-last.
    """
    N, T, C_in = x_ntc.shape
    C_out, Cig, K = w_oik.shape
    G = groups
    Cog = C_out // G
    assert C_in == Cig * G and C_out == Cog * G
    KC = K * Cig
    T_out = (T + 2 * padding - K) // stride + 1
    budget, vmem_limit = _vmem_caps()

    # weight: (C_out, Cig, K) -> (G, K*Cig, Cog)   (contraction ordered (k, ci))
    w_fold = (w_oik.reshape(G, Cog, Cig, K).transpose(0, 3, 2, 1)
              .reshape(G, KC, Cog).astype(jnp.bfloat16))
    b_g = b_o.reshape(G, 1, Cog).astype(jnp.float32)
    x_bf = x_ntc.astype(jnp.bfloat16)

    if C_in >= 128:
        # ---------- in-kernel halo-window path (activations read ~1x from HBM) ----------
        T_tile = _choose_t_tile_window(N, T_out, C_in, C_out, G, KC, Cog, stride,
                                       jnp.dtype(out_dtype).itemsize, budget)
        num_tiles = _round_up(T_out, T_tile) // T_tile
        S = T_tile * stride                         # body rows consumed per tile
        T_alloc = max(num_tiles * S + _HALO, T + padding)
        left = padding
        right = T_alloc - T - left
        x_alloc = jnp.pad(x_bf, ((0, 0), (left, right), (0, 0)))
        taps_per_chunk = max(1, _CHUNK_LANES // Cig)

        kernel = functools.partial(
            _window_conv_kernel, groups=G, cig=Cig, cog=Cog, k_taps=K, stride=stride,
            t_tile=T_tile, taps_per_chunk=taps_per_chunk, apply_lrelu=apply_lrelu)

        out = pl.pallas_call(
            kernel,
            out_shape=jax.ShapeDtypeStruct((N, num_tiles * T_tile, C_out), out_dtype),
            grid_spec=pltpu.PrefetchScalarGridSpec(
                num_scalar_prefetch=0,
                grid=(N, num_tiles),
                in_specs=[
                    # non-overlapping body rows of the padded input
                    pl.BlockSpec((1, S, C_in), lambda n, t: (n, t, 0)),
                    # 64-row halo: starts exactly at the end of this tile's body
                    pl.BlockSpec((1, _HALO, C_in),
                                 lambda n, t: (n, (t + 1) * (S // _HALO), 0)),
                    # full layer weight, VMEM-resident (constant block index)
                    pl.BlockSpec((G, KC, Cog), lambda n, t: (0, 0, 0)),
                    # bias, resident
                    pl.BlockSpec((G, 1, Cog), lambda n, t: (0, 0, 0)),
                ],
                out_specs=pl.BlockSpec((1, T_tile, C_out), lambda n, t: (n, t, 0)),
                scratch_shapes=[pltpu.VMEM((S + _HALO, C_in), jnp.bfloat16)],
            ),
            compiler_params=pltpu.CompilerParams(
                dimension_semantics=("parallel", "parallel"),
                vmem_limit_bytes=vmem_limit),
        )(x_alloc, x_alloc, w_fold, b_g)           # same array feeds body + halo specs
        return out[:, :T_out, :]

    # ---------- tiny-C_in path (layer 1): XLA-side tap fold (K*C_in bytes are tiny) ----------
    x_pad = jnp.pad(x_bf, ((0, 0), (padding, padding), (0, 0)))
    taps = [x_pad[:, k:k + (T_out - 1) * stride + 1:stride, :] for k in range(K)]
    xt = jnp.stack(taps, axis=2).reshape(N, T_out, K, G, Cig)
    x_fold = xt.transpose(0, 3, 1, 2, 4).reshape(N, G, T_out, KC)

    T_tile = max(8, min(_T_TILE_MAX, _round_up(T_out, 8)))
    T_out_p = _round_up(T_out, T_tile)
    if T_out_p != T_out:
        x_fold = jnp.pad(x_fold, ((0, 0), (0, 0), (0, T_out_p - T_out), (0, 0)))

    kernel = functools.partial(_folded_conv_kernel, groups=G, cog=Cog,
                               apply_lrelu=apply_lrelu)
    out = pl.pallas_call(
        kernel,
        out_shape=jax.ShapeDtypeStruct((N, T_out_p, C_out), out_dtype),
        grid_spec=pltpu.PrefetchScalarGridSpec(
            num_scalar_prefetch=0,
            grid=(N, T_out_p // T_tile),
            in_specs=[
                pl.BlockSpec((1, G, T_tile, KC), lambda n, t: (n, 0, t, 0)),
                pl.BlockSpec((G, KC, Cog), lambda n, t: (0, 0, 0)),
                pl.BlockSpec((G, 1, Cog), lambda n, t: (0, 0, 0)),
            ],
            out_specs=pl.BlockSpec((1, T_tile, C_out), lambda n, t: (n, t, 0)),
        ),
        compiler_params=pltpu.CompilerParams(
            dimension_semantics=("parallel", "parallel"),
            vmem_limit_bytes=vmem_limit),
    )(x_fold, w_fold, b_g)
    return out[:, :T_out, :]


# ----------------------------------------------------------------------------
# DiscriminatorS: parameters + forward
# ----------------------------------------------------------------------------
#               (C_in, C_out, K, stride, groups, padding)
_CONV_CFGS = [
    (1,    128,  15, 1, 1,  7),    # padding='same'
    (128,  128,  41, 2, 4,  20),
    (128,  256,  41, 2, 16, 20),
    (256,  512,  41, 4, 16, 20),
    (512,  1024, 41, 4, 16, 20),
    (1024, 1024, 41, 1, 16, 20),   # padding='same'
    (1024, 1024, 5,  1, 1,  2),    # padding='same'
]
_POST_CFG = (1024, 1, 3, 1, 1, 1)  # conv_post, padding='same'


def init_params(key):
    params = []
    for (cin, cout, k, s, g, p) in _CONV_CFGS + [_POST_CFG]:
        key, kw, kb = jax.random.split(key, 3)
        fan_in = (cin // g) * k
        w = jax.random.normal(kw, (cout, cin // g, k), jnp.float32) * np.sqrt(2.0 / fan_in)
        b = 0.01 * jax.random.normal(kb, (cout,), jnp.float32)
        params.append((w, b))
    return params


def discriminator_s_forward(x_nct, params):
    """x_nct: (N, 1, T) in PyTorch NCT layout. Returns (flattened_out, fmap)."""
    x = jnp.transpose(x_nct, (0, 2, 1))   # NCT -> NTC; the chain stays channels-last bf16
    fmap = []
    for (w, b), (cin, cout, k, s, g, p) in zip(params[:-1], _CONV_CFGS):
        x = conv1d_lrelu_pallas(x, w, b, stride=s, padding=p, groups=g,
                                apply_lrelu=True, out_dtype=jnp.bfloat16)
        fmap.append(jnp.transpose(x, (0, 2, 1)).astype(jnp.float32))   # NCT, f32 fmap copy
    w, b = params[-1]
    cin, cout, k, s, g, p = _POST_CFG
    x = conv1d_lrelu_pallas(x, w, b, stride=s, padding=p, groups=g,
                            apply_lrelu=False, out_dtype=jnp.float32)
    fmap.append(jnp.transpose(x, (0, 2, 1)))
    x_flat = x[:, :, 0]                    # (N, T_out, 1) -> (N, T_out) == torch.flatten(x,1,-1)
    return x_flat, fmap


# ----------------------------------------------------------------------------
# Pure-JAX f32 reference (lax.conv_general_dilated) used only for a sanity check
# ----------------------------------------------------------------------------
def _ref_forward(x_nct, params):
    x = x_nct
    fmap = []
    cfgs = _CONV_CFGS + [_POST_CFG]
    for i, ((w, b), (cin, cout, k, s, g, p)) in enumerate(zip(params, cfgs)):
        x = lax.conv_general_dilated(
            x, w, window_strides=(s,), padding=[(p, p)],
            feature_group_count=g, dimension_numbers=("NCH", "OIH", "NCH"),
            precision=lax.Precision.HIGHEST)
        x = x + b[None, :, None]
        if i < len(cfgs) - 1:
            x = jnp.where(x >= 0, x, LRELU_SLOPE * x)
        fmap.append(x)
    return x.reshape(x.shape[0], -1), fmap


if __name__ == "__main__":
    key = jax.random.PRNGKey(0)
    kx, kp = jax.random.split(key)

    N, T = 2, 64
    x = jax.random.normal(kx, (N, 1, T), jnp.float32)   # (batch, 1 audio channel, time)
    params = init_params(kp)

    out, fmap = discriminator_s_forward(x, params)
    out = jax.block_until_ready(out)
    fmap = [jax.block_until_ready(f) for f in fmap]

    # sanity check against a pure-JAX f32 reference (loose tolerance: bf16 MXU chain)
    ref_out, ref_fmap = _ref_forward(x, params)
    np.testing.assert_allclose(np.asarray(out), np.asarray(ref_out), rtol=6e-2, atol=6e-2)
    for a, b in zip(fmap, ref_fmap):
        assert a.shape == b.shape
        np.testing.assert_allclose(np.asarray(a), np.asarray(b), rtol=6e-2, atol=6e-2)

    print("KERNEL_OK")
</pallas_src>

<mosaic_0001>
module attributes {stable_mosaic.version = 11 : i64} {
  func.func @_folded_conv_kernel(%arg0: i32, %arg1: i32, %arg2: memref<1x1x64x15xbf16, #tpu.memory_space<vmem>>, %arg3: memref<1x15x128xbf16, #tpu.memory_space<vmem>>, %arg4: memref<1x1x128xf32, #tpu.memory_space<vmem>>, %arg5: memref<1x64x128xbf16, #tpu.memory_space<vmem>>) attributes {dimension_semantics = [#tpu.dimension_semantics<parallel>, #tpu.dimension_semantics<parallel>], iteration_bounds = array<i64: 2, 1>, scalar_prefetch = 0 : i64, scratch_operands = 0 : i64, tpu.core_type = #tpu.core_type<tc>, window_params = [{transform_indices = @transform_0, window_bounds = array<i64: 1, 1, 64, 15>}, {pipeline_mode = #tpu.pipeline_mode<synchronous>, transform_indices = @transform_1, window_bounds = array<i64: 1, 15, 128>}, {pipeline_mode = #tpu.pipeline_mode<synchronous>, transform_indices = @transform_2, window_bounds = array<i64: 1, 1, 128>}, {transform_indices = @transform_3, window_bounds = array<i64: 1, 64, 128>}]} {
    %c0 = arith.constant 0 : index
    %c0_0 = arith.constant 0 : index
    %c0_1 = arith.constant 0 : index
    %c0_2 = arith.constant 0 : index
    %0 = vector.load %arg2[%c0, %c0_0, %c0_1, %c0_2] : memref<1x1x64x15xbf16, #tpu.memory_space<vmem>>, vector<1x1x64x15xbf16>
    %1 = vector.shape_cast %0 : vector<1x1x64x15xbf16> to vector<64x15xbf16>
    %c0_3 = arith.constant 0 : index
    %c0_4 = arith.constant 0 : index
    %c0_5 = arith.constant 0 : index
    %2 = vector.load %arg3[%c0_3, %c0_4, %c0_5] : memref<1x15x128xbf16, #tpu.memory_space<vmem>>, vector<1x15x128xbf16>
    %3 = vector.shape_cast %2 : vector<1x15x128xbf16> to vector<15x128xbf16>
    %cst = arith.constant dense<0.000000e+00> : vector<64x128xf32>
    %4 = tpu.matmul %1, %3, %cst {dimension_numbers = #tpu.dot_dimension_numbers<[1], [0], [0], [1], [0, 0, 1, 1], [], []>} : vector<64x15xbf16>, vector<15x128xbf16>, vector<64x128xf32> -> vector<64x128xf32>
    %c0_6 = arith.constant 0 : index
    %c0_7 = arith.constant 0 : index
    %c0_8 = arith.constant 0 : index
    %5 = vector.load %arg4[%c0_6, %c0_7, %c0_8] : memref<1x1x128xf32, #tpu.memory_space<vmem>>, vector<1x1x128xf32>
    %6 = vector.shape_cast %5 : vector<1x1x128xf32> to vector<1x128xf32>
    %7 = vector.broadcast %6 : vector<1x128xf32> to vector<64x128xf32>
    %8 = arith.addf %4, %7 : vector<64x128xf32>
    %cst_9 = arith.constant 1.000000e-01 : f32
    %9 = vector.broadcast %cst_9 : f32 to vector<64x128xf32>
    %10 = arith.mulf %9, %8 : vector<64x128xf32>
    %11 = arith.maximumf %8, %10 : vector<64x128xf32>
    %12 = arith.truncf %11 : vector<64x128xf32> to vector<64x128xbf16>
    %c0_10 = arith.constant 0 : index
    %c0_11 = arith.constant 0 : index
    %c0_12 = arith.constant 0 : index
    %13 = vector.load %arg5[%c0_10, %c0_11, %c0_12] : memref<1x64x128xbf16, #tpu.memory_space<vmem>>, vector<1x64x128xbf16>
    %14 = vector.shape_cast %13 : vector<1x64x128xbf16> to vector<64x128xbf16>
    %15 = vector.shape_cast %12 : vector<64x128xbf16> to vector<1x64x128xbf16>
    tpu.vector_store %arg5[%c0_10, %c0_11, %c0_12], %15 {strides = array<i32>} : memref<1x64x128xbf16, #tpu.memory_space<vmem>>, vector<1x64x128xbf16>,
    return
  }
  func.func @transform_0(%arg0: i32, %arg1: i32) -> (i32, i32, i32, i32) {
    %c0_i32 = arith.constant 0 : i32
    %c0_i32_0 = arith.constant 0 : i32
    %c0_i32_1 = arith.constant 0 : i32
    return %arg0, %c0_i32, %arg1, %c0_i32_0 : i32, i32, i32, i32
  }
  func.func @transform_1(%arg0: i32, %arg1: i32) -> (i32, i32, i32) {
    %c0_i32 = arith.constant 0 : i32
    %c0_i32_0 = arith.constant 0 : i32
    %c0_i32_1 = arith.constant 0 : i32
    %c0_i32_2 = arith.constant 0 : i32
    return %c0_i32, %c0_i32_0, %c0_i32_1 : i32, i32, i32
  }
  func.func @transform_2(%arg0: i32, %arg1: i32) -> (i32, i32, i32) {
    %c0_i32 = arith.constant 0 : i32
    %c0_i32_0 = arith.constant 0 : i32
    %c0_i32_1 = arith.constant 0 : i32
    %c0_i32_2 = arith.constant 0 : i32
    return %c0_i32, %c0_i32_0, %c0_i32_1 : i32, i32, i32
  }
  func.func @transform_3(%arg0: i32, %arg1: i32) -> (i32, i32, i32) {
    %c0_i32 = arith.constant 0 : i32
    %c0_i32_0 = arith.constant 0 : i32
    return %arg0, %arg1, %c0_i32 : i32, i32, i32
  }
}

</mosaic_0001>

<llo_original>
// kernel: tpu_custom_call.1
$region0: #{tpu_custom_call.1}
  #allocation0 [shape = 'u32[]', space=smem, size = 0x4, offset = 0x4, fixed_abs, tag = 'smem constant byte address 0x4 - core index']
  #allocation1 [shape = 'u32[144,128]{1,0:T(1,128)}', space=vmem, size = 0x12000, scoped, tag = 'internal scratch']
  %s0 = inlined_call_operand.vmem [shape: bf16[2,1,64,15], index: 0, kind: input, shape index: {}]
  %s1 = inlined_call_operand.vmem [shape: bf16[1,15,128], index: 1, kind: input, shape index: {}]
  %s2 = inlined_call_operand.vmem [shape: f32[1,1,128], index: 2, kind: input, shape index: {}]
  %s3 = inlined_call_operand.hbm [shape: bf16[2,64,128], index: 3, kind: output, shape index: {}]
  %s4 = sld [smem:[#allocation0]]
  $region45: #{tpu_custom_call.1} parent=0
    _
  %s6 = ssub.s32 1, %s4
  %s7 = scalar_select 0, %s6, %s4
  $region1: #{tpu_custom_call.1} parent=0
    #allocation2 [shape = 'u8[32768]{0}', space=vmem, size = 0x8000, scoped, tag = 'output window, operand 0']
    #allocation3 [shape = 's32[2]{0}', space=sflag, size = 0x8, scoped, tag = 'scoped memory for tpu_custom_call.1']
    %8 = vsyncpa [#allocation3], 0
    %s9 = scalar_lea.sflag [#allocation3], 1
    %10 = vsyncpa %s9, 0
    loop: start=0, step=1, limit=4
    $region2: #{tpu_custom_call.1} parent=1 // loop_pre_header
      _
    $region3: #{tpu_custom_call.1} parent=1 // loop_header
      %s12 = sphi 0, %s16
      %p13 = scmp.ge.s32.totalorder %s12, 4
      %s19 = sphi 0, %s31
      %s20 = sphi 0, %s27
      %s21 = sphi 0, %s19
      %s22 = sphi 0, %s20
      %s23 = sphi 0, %s21
      %s24 = sphi 0, %s22
      %s36 = sphi 0, %s38
      %s39 = sphi 0, %s36
      %s40 = sphi 0, %s39
      %s56 = sphi 0, %s40
      %s60 = sphi 0, %s60
      %s62 = sphi 0, %s60
      %s63 = sphi 0, %s62
      %s77 = sphi 0, %s63
      %s81 = sphi 0, %s81
      %s83 = sphi 0, %s81
      %s84 = sphi 0, %s83
      %s98 = sphi 0, %s84
      %s106 = sphi 0, %s108
      %s109 = sphi 0, %s106
      %s110 = sphi 0, %s109
      %s126 = sphi 0, %s110
    $region4: #{tpu_custom_call.1} parent=1 // loop_header_branch
      %15 = sbr.rel (%p13) target = $region8
    $region5: #{tpu_custom_call.1} parent=1 // loop_body
      %s17 = ssub.s32 %s12, 1
      %s18 = ssub.s32 %s12, 2
      %s25 = sadd.s32 1, %s20
      %p26 = scmp.ge.s32.totalorder %s25, 1
      %s27 = scalar_select %p26, 0, %s25
      %s28 = sadd.s32 1, %s19
      %s29 = scalar_select %p26, %s28, %s19
      %p30 = scmp.ge.s32.totalorder %s29, 2
      %s31 = scalar_select %p30, 0, %s29
      %s32 = ssub.s32 %s19, %s31
      %s33 = ssub.s32 %s20, %s27
      %s34 = sor.u32 %s32, %s33
      %p35 = scmp.eq.s32.totalorder %s34, 0
      %s37 = sadd.s32 %s36, 1
      %s38 = scalar_select %p35, %s36, %s37
      %p41 = pneg %p35
      %p42 = scmp.eq.s32.totalorder %s12, 1
      %p43 = por %p41, %p42
      %p44 = scmp.ne.s32.totalorder %s36, %s39
      %p45 = scmp.eq.s32.totalorder %s12, 0
      %p46 = por %p44, %p45
      %p47 = scmp.ne.s32.totalorder %s36, %s39
      %p48 = scmp.eq.s32.totalorder %s17, 1
      %p49 = por %p47, %p48
      %p50 = scmp.ne.s32.totalorder %s39, %s40
      %p51 = scmp.eq.s32.totalorder %s17, 0
      %p52 = por %p50, %p51
      %p53 = scmp.ne.s32.totalorder %s39, %s40
      %p54 = scmp.eq.s32.totalorder %s18, 1
      %p55 = por %p53, %p54
      %p57 = scmp.ne.s32.totalorder %s40, %s56
      %p58 = scmp.eq.s32.totalorder %s18, 0
      %p59 = por %p57, %p58
      %s61 = sadd.s32 %s60, 1
      %p64 = scmp.eq.s32.totalorder %s12, 1
      %p65 = scmp.ne.s32.totalorder %s60, %s62
      %p66 = scmp.eq.s32.totalorder %s12, 0
      %p67 = por %p65, %p66
      %p68 = scmp.ne.s32.totalorder %s60, %s62
      %p69 = scmp.eq.s32.totalorder %s17, 1
      %p70 = por %p68, %p69
      %p71 = scmp.ne.s32.totalorder %s62, %s63
      %p72 = scmp.eq.s32.totalorder %s17, 0
      %p73 = por %p71, %p72
      %p74 = scmp.ne.s32.totalorder %s62, %s63
      %p75 = scmp.eq.s32.totalorder %s18, 1
      %p76 = por %p74, %p75
      %p78 = scmp.ne.s32.totalorder %s63, %s77
      %p79 = scmp.eq.s32.totalorder %s18, 0
      %p80 = por %p78, %p79
      %s82 = sadd.s32 %s81, 1
      %p85 = scmp.eq.s32.totalorder %s12, 1
      %p86 = scmp.ne.s32.totalorder %s81, %s83
      %p87 = scmp.eq.s32.totalorder %s12, 0
      %p88 = por %p86, %p87
      %p89 = scmp.ne.s32.totalorder %s81, %s83
      %p90 = scmp.eq.s32.totalorder %s17, 1
      %p91 = por %p89, %p90
      %p92 = scmp.ne.s32.totalorder %s83, %s84
      %p93 = scmp.eq.s32.totalorder %s17, 0
      %p94 = por %p92, %p93
      %p95 = scmp.ne.s32.totalorder %s83, %s84
      %p96 = scmp.eq.s32.totalorder %s18, 1
      %p97 = por %p95, %p96
      %p99 = scmp.ne.s32.totalorder %s84, %s98
      %p100 = scmp.eq.s32.totalorder %s18, 0
      %p101 = por %p99, %p100
      %s102 = ssub.s32 %s19, %s31
      %s103 = ssub.s32 %s20, %s27
      %s104 = sor.u32 %s102, %s103
      %p105 = scmp.eq.s32.totalorder %s104, 0
      %s107 = sadd.s32 %s106, 1
      %s108 = scalar_select %p105, %s106, %s107
      %p111 = pneg %p105
      %p112 = scmp.eq.s32.totalorder %s12, 1
      %p113 = por %p111, %p112
      %p114 = scmp.ne.s32.totalorder %s106, %s109
      %p115 = scmp.eq.s32.totalorder %s12, 0
      %p116 = por %p114, %p115
      %p117 = scmp.ne.s32.totalorder %s106, %s109
      %p118 = scmp.eq.s32.totalorder %s17, 1
      %p119 = por %p117, %p118
      %p120 = scmp.ne.s32.totalorder %s109, %s110
      %p121 = scmp.eq.s32.totalorder %s17, 0
      %p122 = por %p120, %p121
      %p123 = scmp.ne.s32.totalorder %s109, %s110
      %p124 = scmp.eq.s32.totalorder %s18, 1
      %p125 = por %p123, %p124
      %p127 = scmp.ne.s32.totalorder %s110, %s126
      %p128 = scmp.eq.s32.totalorder %s18, 0
      %p129 = por %p127, %p128
      %p130 = scmp.le.s32.totalorder 1, %s12
      %p131 = scmp.lt.s32.totalorder %s12, 3
      %p132 = pnand %p130, %p131
      %p133 = pneg %p132
      // Predicated region
      $region9: #{tpu_custom_call.1} parent=5 // pred_check
        _
      $region10: #{tpu_custom_call.1} parent=5 // pred_check_branch
        %135 = sbr.rel (%p132) target = $region12
      $region11: #{tpu_custom_call.1} parent=5 // pred_region
        %s136 = ssub.s32 %s12, 1
        // Predicated region
        $region13: #{tpu_custom_call.1} parent=11 // pred_check
          %p137 = pneg %p73
        $region14: #{tpu_custom_call.1} parent=11 // pred_check_branch
          %139 = sbr.rel (%p137) target = $region16
        $region15: #{tpu_custom_call.1} parent=11 // pred_region
          _
        $region16: #{tpu_custom_call.1} parent=11 // pred_fallthru
          _
        // Predicated region
        $region17: #{tpu_custom_call.1} parent=11 // pred_check
          %p140 = pneg %p94
        $region18: #{tpu_custom_call.1} parent=11 // pred_check_branch
          %142 = sbr.rel (%p140) target = $region20
        $region19: #{tpu_custom_call.1} parent=11 // pred_region
          _
        $region20: #{tpu_custom_call.1} parent=11 // pred_fallthru
          _
      $region12: #{tpu_custom_call.1} parent=5 // pred_fallthru
        _
      %p143 = scmp.lt.s32.totalorder %s12, 2
      // Predicated region
      $region21: #{tpu_custom_call.1} parent=5 // pred_check
        %p144 = pneg %p143
      $region22: #{tpu_custom_call.1} parent=5 // pred_check_branch
        %146 = sbr.rel (%p144) target = $region24
      $region23: #{tpu_custom_call.1} parent=5 // pred_region
        // Predicated region
        $region25: #{tpu_custom_call.1} parent=23 // pred_check
          %p147 = pneg %p46
        $region26: #{tpu_custom_call.1} parent=23 // pred_check_branch
          %149 = sbr.rel (%p147) target = $region28
        $region27: #{tpu_custom_call.1} parent=23 // pred_region
          %s150 = smul.u32 8, %s20
          %p151 = scmp.lt.s32.totalorder %s19, 1
          %s152 = scalar_select %p151, %s19, 1
          %p153 = scmp.lt.s32.totalorder %s150, 7
          %s154 = scalar_select %p153, %s150, 7
          %s155 = smul.addr %s152, 8
          %s156 = sadd.s32 %s154, %s155
          %s157 = smul.addr %s156, 4
          %s158 = scalar_lea.vmem %s0, %s157
          %s159 = smul.u32 8, %s20
        $region28: #{tpu_custom_call.1} parent=23 // pred_fallthru
          _
      $region24: #{tpu_custom_call.1} parent=5 // pred_fallthru
        _
      %p160 = scmp.le.s32.totalorder 1, %s12
      %p161 = scmp.lt.s32.totalorder %s12, 3
      %p162 = pnand %p160, %p161
      %p163 = pneg %p162
      // Predicated region
      $region29: #{tpu_custom_call.1} parent=5 // pred_check
        _
      $region30: #{tpu_custom_call.1} parent=5 // pred_check_branch
        %165 = sbr.rel (%p162) target = $region32
      $region31: #{tpu_custom_call.1} parent=5 // pred_region
        %s166 = ssub.s32 %s12, 1
        %s167 = smul.u32 8, %s22
        %p168 = scmp.lt.s32.totalorder %s21, 1
        %s169 = scalar_select %p168, %s21, 1
        %p170 = scmp.lt.s32.totalorder %s167, 7
        %s171 = scalar_select %p170, %s167, 7
        %s172 = smul.addr %s169, 8
        %s173 = sadd.s32 %s171, %s172
        %s174 = smul.addr %s173, 4
        %s175 = scalar_lea.vmem %s0, %s174
        %p176 = pneg %p52
        %p177 = pneg %p49
        %p178 = pneg %p73
        %p179 = pneg %p70
        %p180 = pneg %p94
        %p181 = pneg %p91
        %p182 = pneg %p122
        %p183 = pneg %p119
        %s184 = sand.u32 %s109, 1
        %s185 = scalar_lea.sflag [#allocation3], %s184
        %s186 = sand.u32 %s109, 1
        %s187 = smul.addr %s186, 32
        %s188 = scalar_lea.vmem [#allocation2], %s187
        %s189 = smul.u32 8, %s22
        %p190 = scmp.lt.s32.totalorder %s21, 1
        %s191 = scalar_select %p190, %s21, 1
        %p192 = scmp.lt.s32.totalorder %s189, 7
        %s193 = scalar_select %p192, %s189, 7
        %s194 = smul.addr %s191, 8
        %s195 = sadd.s32 %s193, %s194
        %s196 = smul.addr %s195, 4
        %s197 = scalar_lea.vmem %s0, %s196
        %s198 = smul.u32 8, %s22
        %s199 = smul.u32 8, %s22
        %v201 = vld [vmem:[%s197] sm:$0xf]
        %v202 = vld [vmem:[%s197 + $0x4] sm:$0xf]
        %v203 = vld [vmem:[%s197 + $0x8] sm:$0xf]
        %v204 = vld [vmem:[%s197 + $0xc] sm:$0xf]
        %v205 = vld [vmem:[%s197 + $0x10] sm:$0xf]
        %v206 = vld [vmem:[%s197 + $0x14] sm:$0xf]
        %v207 = vld [vmem:[%s197 + $0x18] sm:$0xf]
        %v208 = vld [vmem:[%s197 + $0x1c] sm:$0xf]
        %v209 = vld [vmem:[%s1] sm:$0xf]
        %v210 = vld [vmem:[%s1 + $0x4] sm:$0xf]
        %v211 = vld [vmem:[%s2] sm:$0x1]
        %v213 = vlaneseq
        %v214 = vshrl.u32 %v213, 7
        %v215 = vsub.s32 0, %v214
        %v216 = vrot.slane %v211, %v215
        %v226 = vunpack.c.l.b16 %v201
        %v227 = vunpack.c.l.b16 %v202
        %v228 = vunpack.c.l.b16 %v203
        %v229 = vunpack.c.l.b16 %v204
        %v230 = vunpack.c.l.b16 %v205
        %v231 = vunpack.c.l.b16 %v206
        %v232 = vunpack.c.l.b16 %v207
        %v233 = vunpack.c.l.b16 %v208
        %v234 = vpack.c.b16 %v227, %v226
        %v235 = vpack.c.b16 %v229, %v228
        %v236 = vpack.c.b16 %v231, %v230
        %v237 = vpack.c.b16 %v233, %v232
        %v240 = vunpack.c.l.b16 %v209
        %v241 = vunpack.c.l.b16 %v210
        %v242 = vpack.c.b16 %v241, %v240
        %vm243 = vcmask 121856
        %v245 = vsel %vm243, %v234, 0
        %v248 = vsel %vm243, %v235, 0
        %v251 = vsel %vm243, %v236, 0
        %v254 = vsel %vm243, %v237, 0
        %vm256 = vcmask 1046528
        %vm257 = vcmask 1047552
        %v258 = vsel %vm256, 4294967295, 65535
        %v259 = vsel %vm257, %v258, 0
        %v261 = vand.u32 %v242, %v259
        %263 = vmatprep.subr.bf16.mxu0 0
        %264 = vmatpush1.bf16.msra.mxu0 %v261
        %265 = vmatprep.subr.bf16.mxu0 0
        %266 = vmatpush1.bf16.msra.mxu0 0
        %267 = vmatprep.subr.bf16.mxu0 0
        %268 = vmatpush1.bf16.msra.mxu0 0
        %269 = vmatprep.subr.bf16.mxu0 0
        %270 = vmatpush1.bf16.msra.mxu0 0
        %271 = vmatprep.subr.bf16.mxu0 0
        %272 = vmatpush1.bf16.msra.mxu0 0
        %273 = vmatprep.subr.bf16.mxu0 0
        %274 = vmatpush1.bf16.msra.mxu0 0
        %275 = vmatprep.subr.bf16.mxu0 0
        %276 = vmatpush1.bf16.msra.mxu0 0
        %277 = vmatprep.subr.bf16.mxu0 0
        %278 = vmatpush1.bf16.msra.mxu0 0
        %279 = vmatprep.subr.bf16.mxu0 0
        %280 = vmatpush1.bf16.msra.mxu0 0
        %281 = vmatprep.subr.bf16.mxu0 0
        %282 = vmatpush1.bf16.msra.mxu0 0
        %283 = vmatprep.subr.bf16.mxu0 0
        %284 = vmatpush1.bf16.msra.mxu0 0
        %285 = vmatprep.subr.bf16.mxu0 0
        %286 = vmatpush1.bf16.msra.mxu0 0
        %287 = vmatprep.subr.bf16.mxu0 0
        %288 = vmatpush1.bf16.msra.mxu0 0
        %289 = vmatprep.subr.bf16.mxu0 0
        %290 = vmatpush1.bf16.msra.mxu0 0
        %291 = vmatprep.subr.bf16.mxu0 0
        %292 = vmatpush1.bf16.msra.mxu0 0
        %293 = vmatprep.subr.bf16.mxu0 0
        %294 = vmatpush1.bf16.msra.mxu0 0
        %295 = vmatprep.mubr.bf16.mxu0 0
        %296 = vmatmul.mubr.bf16.gmra.mrb[0].mxu0 %v245
        %v297 = vpop.f32.mrb[0].mxu0
        %v298 = vadd.f32 %v216, %v297
        %v299 = vpop.f32.mrb[0].mxu0
        %v300 = vpop.f32.mrb[0].mxu0
        %v301 = vadd.f32 %v216, %v300
        %v302 = vpop.f32.mrb[0].mxu0
        %303 = vmatprep.mubr.bf16.mxu0 0
        %304 = vmatmul.mubr.bf16.gmra.mrb[0].mxu0 %v248
        %v305 = vpop.f32.mrb[0].mxu0
        %v306 = vadd.f32 %v216, %v305
        %v307 = vpop.f32.mrb[0].mxu0
        %v308 = vpop.f32.mrb[0].mxu0
        %v309 = vadd.f32 %v216, %v308
        %v310 = vpop.f32.mrb[0].mxu0
        %311 = vmatprep.mubr.bf16.mxu0 0
        %312 = vmatmul.mubr.bf16.gmra.mrb[0].mxu0 %v251
        %v313 = vpop.f32.mrb[0].mxu0
        %v314 = vadd.f32 %v216, %v313
        %v315 = vpop.f32.mrb[0].mxu0
        %v316 = vpop.f32.mrb[0].mxu0
        %v317 = vadd.f32 %v216, %v316
        %v318 = vpop.f32.mrb[0].mxu0
        %319 = vmatprep.mubr.bf16.mxu0 0
        %320 = vmatmul.mubr.bf16.gmra.mrb[0].mxu0 %v254
        %v321 = vpop.f32.mrb[0].mxu0
        %v322 = vadd.f32 %v216, %v321
        %v323 = vpop.f32.mrb[0].mxu0
        %v324 = vpop.f32.mrb[0].mxu0
        %v325 = vadd.f32 %v216, %v324
        %v326 = vpop.f32.mrb[0].mxu0
        %327 = vdwg.mxu0
        %v328 = vmul.f32 %v298, 0.1
        %v329 = vmul.f32 %v301, 0.1
        %v330 = vmul.f32 %v306, 0.1
        %v331 = vmul.f32 %v309, 0.1
        %v332 = vmul.f32 %v314, 0.1
        %v333 = vmul.f32 %v317, 0.1
        %v334 = vmul.f32 %v322, 0.1
        %v335 = vmul.f32 %v325, 0.1
        %v336 = vmax.f32 %v298, %v328
        %v337 = vmax.f32 %v301, %v329
        %v338 = vmax.f32 %v306, %v330
        %v339 = vmax.f32 %v309, %v331
        %v340 = vmax.f32 %v314, %v332
        %v341 = vmax.f32 %v317, %v333
        %v342 = vmax.f32 %v322, %v334
        %v343 = vmax.f32 %v325, %v335
        %v344 = vpack.c.bf16 %v337, %v336
        %v345 = vpack.c.bf16 %v339, %v338
        %v346 = vpack.c.bf16 %v341, %v340
        %v347 = vpack.c.bf16 %v343, %v342
        %v352 = vunpack.c.l.b16 %v344
        %v353 = vunpack.c.h.b16 %v344
        %v354 = vunpack.c.l.b16 %v345
        %v355 = vunpack.c.h.b16 %v345
        %v356 = vunpack.c.l.b16 %v346
        %v357 = vunpack.c.h.b16 %v346
        %v358 = vunpack.c.l.b16 %v347
        %v359 = vunpack.c.h.b16 %v347
        %v360 = vpack.c.b16 %v352, %v352
        %v361 = vpack.c.b16 %v353, %v353
        %v362 = vpack.c.b16 %v354, %v354
        %v363 = vpack.c.b16 %v355, %v355
        %v364 = vpack.c.b16 %v356, %v356
        %v365 = vpack.c.b16 %v357, %v357
        %v366 = vpack.c.b16 %v358, %v358
        %v367 = vpack.c.b16 %v359, %v359
        %376 = vst [vmem:[%s188] sm:$0xf] %v360
        %377 = vst [vmem:[%s188 + $0x4] sm:$0xf] %v361
        %378 = vst [vmem:[%s188 + $0x8] sm:$0xf] %v362
        %379 = vst [vmem:[%s188 + $0xc] sm:$0xf] %v363
        %380 = vst [vmem:[%s188 + $0x10] sm:$0xf] %v364
        %381 = vst [vmem:[%s188 + $0x14] sm:$0xf] %v365
        %382 = vst [vmem:[%s188 + $0x18] sm:$0xf] %v366
        %383 = vst [vmem:[%s188 + $0x1c] sm:$0xf] %v367
        %s384 = sand.u32 %s109, 1
        %s385 = scalar_lea.sflag [#allocation3], %s384
        %s386 = sand.u32 %s109, 1
        %s387 = smul.addr %s386, 32
        %s388 = scalar_lea.vmem [#allocation2], %s387
        // Predicated region
        $region33: #{tpu_custom_call.1} parent=31 // pred_check
          %p389 = pneg %p119
        $region34: #{tpu_custom_call.1} parent=31 // pred_check_branch
          %391 = sbr.rel (%p389) target = $region36
        $region35: #{tpu_custom_call.1} parent=31 // pred_region
          %s392 = smul.u32 8, %s22
          %s394 = ssub.s32 512, 512
          %395 = vsyncadd %s385, %s394
          %s396 = smul.addr %s21, 8
          %s397 = sadd.s32 %s392, %s396
          %s398 = smul.addr %s397, 64
          %s399 = scalar_lea.hbm %s3, %s398
          %s400 = sshll.u32 %s388, 4
          %s401 = int_to_ptr.vmem [resolvable:$true] %s400
          %406 = dma.vmem_to_hbm [thread:$0]  %s401, 512, %s399, %s385, 64, 64, 4
        $region36: #{tpu_custom_call.1} parent=31 // pred_fallthru
          _
      $region32: #{tpu_custom_call.1} parent=5 // pred_fallthru
        _
      %p407 = scmp.le.s32.totalorder 2, %s12
      // Predicated region
      $region37: #{tpu_custom_call.1} parent=5 // pred_check
        %p408 = pneg %p407
      $region38: #{tpu_custom_call.1} parent=5 // pred_check_branch
        %410 = sbr.rel (%p408) target = $region40
      $region39: #{tpu_custom_call.1} parent=5 // pred_region
        %s411 = ssub.s32 %s12, 2
        // Predicated region
        $region41: #{tpu_custom_call.1} parent=39 // pred_check
          %p412 = pneg %p125
        $region42: #{tpu_custom_call.1} parent=39 // pred_check_branch
          %414 = sbr.rel (%p412) target = $region44
        $region43: #{tpu_custom_call.1} parent=39 // pred_region
          %s415 = sand.u32 %s110, 1
          %s416 = scalar_lea.sflag [#allocation3], %s415
          %s417 = sand.u32 %s110, 1
          %s418 = smul.addr %s417, 32
          %s419 = scalar_lea.vmem [#allocation2], %s418
          %420 = dma.done %s416, 512
        $region44: #{tpu_custom_call.1} parent=39 // pred_fallthru
          _
      $region40: #{tpu_custom_call.1} parent=5 // pred_fallthru
        _
    $region6: #{tpu_custom_call.1} parent=1 // loop_footer
      %s16 = sadd.s32 1, %s12
    $region7: #{tpu_custom_call.1} parent=1 // loop_footer_branch
      %11 = sbr.rel target = $region3
    $region8: #{tpu_custom_call.1} parent=1 // loop_exit
      _
    %421 = vsyncpa [#allocation3], 1
    %s422 = scalar_lea.sflag [#allocation3], 1
    %423 = vsyncpa %s422, 1

</llo_original>
